<compile_context>
chip_gen: v7x
topology: tpu7x:2x2x1
jax: 0.10.0
libtpu: 0.0.40
codegen_flags: <defaults>
</compile_context>

<pallas_src>
import functools

import jax
import jax.numpy as jnp
from jax.experimental import pallas as pl
from jax.experimental.pallas import tpu as pltpu

HIDDEN = 256     # hidden width of each head (PyTorch: nn.Linear(D, 256))
PAD_C = 128      # per-head class axis padded to one full 128-lane vreg
SUBLANE = 8      # f32 sublane tile


def _masked_softmax(logits, num_valid):
    """Softmax over the first `num_valid` lanes of a (B, PAD_C) f32 block."""
    lane = jax.lax.broadcasted_iota(jnp.int32, logits.shape, dimension=1)
    masked = jnp.where(lane < num_valid, logits, -jnp.inf)
    m = jnp.max(masked, axis=-1, keepdims=True)
    e = jnp.exp(masked - m)                       # padded lanes -> exp(-inf) = 0
    return e * pl.reciprocal(jnp.sum(e, axis=-1, keepdims=True), approx=True)


def _sigmoid(logits):
    return pl.reciprocal(1.0 + jnp.exp(-logits), approx=True)


def _fused_heads_kernel(x_ref, w1_ref, b1_ref, w2_ref, b2_ref, out_ref, *,
                        sentiment_classes, intent_classes):
    """Both heads: (B,D)@(D,512) then block-diagonal (B,512)@(512,256)."""
    x = x_ref[...].astype(jnp.bfloat16)                                  # (B, D)
    h = jnp.dot(x, w1_ref[...], preferred_element_type=jnp.float32)      # (B, 512)
    h = h + b1_ref[...]                                                  # + (1, 512)
    h = jnp.maximum(h, 0.0).astype(jnp.bfloat16)                         # ReLU -> bf16

    logits = jnp.dot(h, w2_ref[...], preferred_element_type=jnp.float32)  # (B, 256)
    logits = logits + b2_ref[...]                                         # + (1, 256)

    logits_s = logits[:, :PAD_C]          # sentiment logits (B, 128), vreg-aligned
    logits_i = logits[:, PAD_C:]          # intent    logits (B, 128), vreg-aligned

    if sentiment_classes > 2:
        out_ref[:, :PAD_C] = _masked_softmax(logits_s, sentiment_classes)
    else:
        out_ref[:, :PAD_C] = _sigmoid(logits_s)
    if intent_classes > 2:
        out_ref[:, PAD_C:] = _masked_softmax(logits_i, intent_classes)
    else:
        out_ref[:, PAD_C:] = _sigmoid(logits_i)


def run_fused_heads(embeddings, w1, b1, w2, b2, *, sentiment_classes, intent_classes):
    """One pallas_call computing both heads; returns ((B,Cs), (B,Ci)) f32."""
    B = embeddings.shape[0]
    B_pad = ((B + SUBLANE - 1) // SUBLANE) * SUBLANE
    x = embeddings
    if B_pad != B:
        x = jnp.pad(x, ((0, B_pad - B), (0, 0)))     # pad batch to 8-sublane tile

    kernel = functools.partial(_fused_heads_kernel,
                               sentiment_classes=sentiment_classes,
                               intent_classes=intent_classes)
    out = pl.pallas_call(
        kernel,
        out_shape=jax.ShapeDtypeStruct((B_pad, 2 * PAD_C), jnp.float32),
        in_specs=[
            pl.BlockSpec(memory_space=pltpu.VMEM),   # x   (B_pad, D)   f32
            pl.BlockSpec(memory_space=pltpu.VMEM),   # W1  (D, 512)     bf16 (fused heads)
            pl.BlockSpec(memory_space=pltpu.VMEM),   # b1  (1, 512)     f32
            pl.BlockSpec(memory_space=pltpu.VMEM),   # W2  (512, 256)   bf16 (block-diag)
            pl.BlockSpec(memory_space=pltpu.VMEM),   # b2  (1, 256)     f32
        ],
        out_specs=pl.BlockSpec(memory_space=pltpu.VMEM),
    )(x, w1, b1, w2, b2)

    sent = out[:B, :sentiment_classes]
    intent = out[:B, PAD_C:PAD_C + intent_classes]
    return sent, intent


class MultiTaskSentenceTransformerPallas:
    """JAX/Pallas port of the two MLP heads of MultiTaskSentenceTransformer."""

    def __init__(self, embedding_dim, sentiment_classes, intent_classes, seed=42):
        assert sentiment_classes <= PAD_C and intent_classes <= PAD_C
        self.embedding_dim = embedding_dim
        self.sentiment_classes = sentiment_classes
        self.intent_classes = intent_classes

        key = jax.random.PRNGKey(seed)
        keys = jax.random.split(key, 8)

        def linear_init(kw, kb, fan_in, fan_out):
            # Deterministic stand-in for nn.Linear default init (+/- 1/sqrt(fan_in)).
            bound = 1.0 / jnp.sqrt(jnp.float32(fan_in))
            w = jax.random.uniform(kw, (fan_in, fan_out), jnp.float32, -bound, bound)
            b = jax.random.uniform(kb, (1, fan_out), jnp.float32, -bound, bound)
            return w, b

        s_w1, s_b1 = linear_init(keys[0], keys[1], embedding_dim, HIDDEN)
        s_w2, s_b2 = linear_init(keys[2], keys[3], HIDDEN, sentiment_classes)
        i_w1, i_b1 = linear_init(keys[4], keys[5], embedding_dim, HIDDEN)
        i_w2, i_b2 = linear_init(keys[6], keys[7], HIDDEN, intent_classes)

        # Fuse first layers of both heads: one (D, 512) bf16 matmul in-kernel.
        self.w1 = jnp.concatenate([s_w1, i_w1], axis=1).astype(jnp.bfloat16)
        self.b1 = jnp.concatenate([s_b1, i_b1], axis=1)              # f32 (1, 512)

        # Pack second layers block-diagonally: one (512, 256) bf16 matmul.
        w2 = jnp.zeros((2 * HIDDEN, 2 * PAD_C), jnp.float32)
        w2 = w2.at[:HIDDEN, :sentiment_classes].set(s_w2)
        w2 = w2.at[HIDDEN:, PAD_C:PAD_C + intent_classes].set(i_w2)
        self.w2 = w2.astype(jnp.bfloat16)

        b2 = jnp.zeros((1, 2 * PAD_C), jnp.float32)
        b2 = b2.at[:, :sentiment_classes].set(s_b2)
        b2 = b2.at[:, PAD_C:PAD_C + intent_classes].set(i_b2)
        self.b2 = b2

    def forward_both(self, embeddings):
        """Single fused kernel launch producing (sentiment, intent) outputs."""
        return run_fused_heads(
            embeddings, self.w1, self.b1, self.w2, self.b2,
            sentiment_classes=self.sentiment_classes,
            intent_classes=self.intent_classes)

    def __call__(self, embeddings, task="sentiment"):
        if task not in ("sentiment", "intent"):
            raise ValueError("Invalid task! Choose 'sentiment' or 'intent'.")
        sent, intent = self.forward_both(embeddings)
        return sent if task == "sentiment" else intent


def _reference_heads(x, w1, b1, w2, b2, sentiment_classes, intent_classes):
    """Pure-JAX reference of the same math (bf16 weights, f32 accumulation)."""
    xb = x.astype(jnp.bfloat16)
    h = jnp.dot(xb, w1, preferred_element_type=jnp.float32) + b1
    h = jnp.maximum(h, 0.0).astype(jnp.bfloat16)
    logits = jnp.dot(h, w2, preferred_element_type=jnp.float32) + b2
    ls = logits[:, :sentiment_classes]
    li = logits[:, PAD_C:PAD_C + intent_classes]
    sent = jax.nn.softmax(ls, axis=1) if sentiment_classes > 2 else jax.nn.sigmoid(ls)
    intent = jax.nn.softmax(li, axis=1) if intent_classes > 2 else jax.nn.sigmoid(li)
    return sent, intent


if __name__ == "__main__":
    # batch=2 sentences, embedding_dim=384 (all-MiniLM-L6-v2 sentence dim),
    # sentiment_classes=2 (-> Sigmoid), intent_classes=4 (-> Softmax).
    B, D = 2, 384
    SENTIMENT_CLASSES, INTENT_CLASSES = 2, 4

    key = jax.random.PRNGKey(0)
    # Stand-in for SentenceTransformer.encode(sentences) output.
    embeddings = jax.random.normal(key, (B, D), dtype=jnp.float32)

    model = MultiTaskSentenceTransformerPallas(
        embedding_dim=D,
        sentiment_classes=SENTIMENT_CLASSES,
        intent_classes=INTENT_CLASSES,
        seed=42,
    )

    # One fused kernel launch computes both heads.
    sentiment_out, intent_out = model.forward_both(embeddings)
    sentiment_out = jax.block_until_ready(sentiment_out)
    intent_out = jax.block_until_ready(intent_out)

    # Correctness check against a pure-JAX reference of the same math.
    sent_ref, int_ref = _reference_heads(
        embeddings, model.w1, model.b1, model.w2, model.b2,
        SENTIMENT_CLASSES, INTENT_CLASSES)

    assert sentiment_out.shape == (B, SENTIMENT_CLASSES)
    assert intent_out.shape == (B, INTENT_CLASSES)
    # Tolerance accounts for the EUP approximate reciprocal (~1e-4 relative).
    assert jnp.allclose(sentiment_out, sent_ref, atol=2e-3, rtol=2e-3)
    assert jnp.allclose(intent_out, int_ref, atol=2e-3, rtol=2e-3)
    assert jnp.allclose(jnp.sum(intent_out, axis=1), 1.0, atol=2e-3)

    print("KERNEL_OK")
</pallas_src>

<mosaic_0001>
module attributes {stable_mosaic.version = 11 : i64} {
  func.func @_fused_heads_kernel(%arg0: memref<8x384xf32, #tpu.memory_space<vmem>>, %arg1: memref<384x512xbf16, #tpu.memory_space<vmem>>, %arg2: memref<1x512xf32, #tpu.memory_space<vmem>>, %arg3: memref<512x256xbf16, #tpu.memory_space<vmem>>, %arg4: memref<1x256xf32, #tpu.memory_space<vmem>>, %arg5: memref<8x256xf32, #tpu.memory_space<vmem>>) attributes {dimension_semantics = [], scalar_prefetch = 0 : i64, scratch_operands = 0 : i64, tpu.core_type = #tpu.core_type<tc>} {
    %c0 = arith.constant 0 : index
    %c0_0 = arith.constant 0 : index
    %0 = vector.load %arg0[%c0, %c0_0] : memref<8x384xf32, #tpu.memory_space<vmem>>, vector<8x384xf32>
    %1 = arith.truncf %0 : vector<8x384xf32> to vector<8x384xbf16>
    %c0_1 = arith.constant 0 : index
    %c0_2 = arith.constant 0 : index
    %2 = vector.load %arg1[%c0_1, %c0_2] : memref<384x512xbf16, #tpu.memory_space<vmem>>, vector<384x512xbf16>
    %cst = arith.constant dense<0.000000e+00> : vector<8x512xf32>
    %3 = tpu.matmul %1, %2, %cst {dimension_numbers = #tpu.dot_dimension_numbers<[1], [0], [0], [1], [0, 0, 1, 1], [], []>} : vector<8x384xbf16>, vector<384x512xbf16>, vector<8x512xf32> -> vector<8x512xf32>
    %c0_3 = arith.constant 0 : index
    %c0_4 = arith.constant 0 : index
    %4 = vector.load %arg2[%c0_3, %c0_4] : memref<1x512xf32, #tpu.memory_space<vmem>>, vector<1x512xf32>
    %5 = vector.broadcast %4 : vector<1x512xf32> to vector<8x512xf32>
    %6 = arith.addf %3, %5 : vector<8x512xf32>
    %cst_5 = arith.constant 0.000000e+00 : f32
    %7 = vector.broadcast %cst_5 : f32 to vector<8x512xf32>
    %8 = arith.maximumf %6, %7 : vector<8x512xf32>
    %9 = arith.truncf %8 : vector<8x512xf32> to vector<8x512xbf16>
    %c0_6 = arith.constant 0 : index
    %c0_7 = arith.constant 0 : index
    %10 = vector.load %arg3[%c0_6, %c0_7] : memref<512x256xbf16, #tpu.memory_space<vmem>>, vector<512x256xbf16>
    %cst_8 = arith.constant dense<0.000000e+00> : vector<8x256xf32>
    %11 = tpu.matmul %9, %10, %cst_8 {dimension_numbers = #tpu.dot_dimension_numbers<[1], [0], [0], [1], [0, 0, 1, 1], [], []>} : vector<8x512xbf16>, vector<512x256xbf16>, vector<8x256xf32> -> vector<8x256xf32>
    %c0_9 = arith.constant 0 : index
    %c0_10 = arith.constant 0 : index
    %12 = vector.load %arg4[%c0_9, %c0_10] : memref<1x256xf32, #tpu.memory_space<vmem>>, vector<1x256xf32>
    %13 = vector.broadcast %12 : vector<1x256xf32> to vector<8x256xf32>
    %14 = arith.addf %11, %13 : vector<8x256xf32>
    %15 = vector.extract_strided_slice %14 {offsets = [0, 0], sizes = [8, 128], strides = [1, 1]} : vector<8x256xf32> to vector<8x128xf32>
    %16 = vector.extract_strided_slice %14 {offsets = [0, 128], sizes = [8, 128], strides = [1, 1]} : vector<8x256xf32> to vector<8x128xf32>
    %cst_11 = arith.constant 0.000000e+00 : f32
    %17 = vector.broadcast %cst_11 : f32 to vector<8x128xf32>
    %18 = arith.subf %17, %15 : vector<8x128xf32>
    %19 = math.exp %18 : vector<8x128xf32>
    %cst_12 = arith.constant 1.000000e+00 : f32
    %20 = vector.broadcast %cst_12 : f32 to vector<8x128xf32>
    %21 = arith.addf %20, %19 : vector<8x128xf32>
    %22 = tpu.reciprocal %21 {approx = true} : vector<8x128xf32> -> vector<8x128xf32>
    %c0_13 = arith.constant 0 : index
    %c0_14 = arith.constant 0 : index
    %23 = vector.load %arg5[%c0_13, %c0_14] : memref<8x256xf32, #tpu.memory_space<vmem>>, vector<8x128xf32>
    tpu.vector_store %arg5[%c0_13, %c0_14], %22 {strides = array<i32>} : memref<8x256xf32, #tpu.memory_space<vmem>>, vector<8x128xf32>,
    %24 = tpu.iota {dimensions = array<i32: 1>} : vector<8x128xi32>
    %c4_i32 = arith.constant 4 : i32
    %25 = vector.broadcast %c4_i32 : i32 to vector<8x128xi32>
    %26 = arith.cmpi slt, %24, %25 : vector<8x128xi32>
    %cst_15 = arith.constant 0xFF800000 : f32
    %27 = vector.broadcast %cst_15 : f32 to vector<8x128xf32>
    %28 = arith.select %26, %16, %27 : vector<8x128xi1>, vector<8x128xf32>
    %cst_16 = arith.constant dense<0xFF800000> : vector<8xf32>
    %29 = vector.multi_reduction <maximumf>, %28, %cst_16 [1] : vector<8x128xf32> to vector<8xf32>
    %30 = vector.shape_cast %29 : vector<8xf32> to vector<8x1xf32>
    %31 = vector.broadcast %30 : vector<8x1xf32> to vector<8x128xf32>
    %32 = arith.subf %28, %31 : vector<8x128xf32>
    %33 = math.exp %32 : vector<8x128xf32>
    %cst_17 = arith.constant dense<0.000000e+00> : vector<8xf32>
    %34 = vector.multi_reduction <add>, %33, %cst_17 [1] : vector<8x128xf32> to vector<8xf32>
    %35 = vector.shape_cast %34 : vector<8xf32> to vector<8x1xf32>
    %36 = tpu.reciprocal %35 {approx = true} : vector<8x1xf32> -> vector<8x1xf32>
    %37 = vector.broadcast %36 : vector<8x1xf32> to vector<8x128xf32>
    %38 = arith.mulf %33, %37 : vector<8x128xf32>
    %c0_18 = arith.constant 0 : index
    %c128 = arith.constant 128 : index
    %39 = vector.load %arg5[%c0_18, %c128] : memref<8x256xf32, #tpu.memory_space<vmem>>, vector<8x128xf32>
    tpu.vector_store %arg5[%c0_18, %c128], %38 {strides = array<i32>} : memref<8x256xf32, #tpu.memory_space<vmem>>, vector<8x128xf32>,
    return
  }
}

</mosaic_0001>

<llo_original>
// kernel: tpu_custom_call.1
$region0: #{tpu_custom_call.1}
  #allocation0 [shape = 'u32[]', space=smem, size = 0x4, offset = 0x4, fixed_abs, tag = 'smem constant byte address 0x4 - core index']
  #allocation1 [shape = 'u32[144,128]{1,0:T(1,128)}', space=vmem, size = 0x12000, scoped, tag = 'internal scratch']
  %s0 = inlined_call_operand.hbm [shape: f32[8,384], index: 0, kind: input, shape index: {}]
  %s1 = inlined_call_operand.hbm [shape: bf16[384,512], index: 1, kind: input, shape index: {}]
  %s2 = inlined_call_operand.vmem [shape: f32[1,512], index: 2, kind: input, shape index: {}]
  %s3 = inlined_call_operand.hbm [shape: bf16[512,256], index: 3, kind: input, shape index: {}]
  %s4 = inlined_call_operand.vmem [shape: f32[1,256], index: 4, kind: input, shape index: {}]
  %s5 = inlined_call_operand.hbm [shape: f32[8,256], index: 5, kind: output, shape index: {}]
  %s6 = sld [smem:[#allocation0]]
  $region42: #{tpu_custom_call.1} parent=0
    _
  %s8 = ssub.s32 1, %s6
  %s9 = scalar_select 0, %s8, %s6
  $region1: #{tpu_custom_call.1} parent=0
    #allocation2 [shape = 'u8[12288]{0}', space=vmem, size = 0x3000, scoped, tag = 'input window, operand 0, single buffered']
    #allocation3 [shape = 's32[1]{0}', space=sflag, size = 0x4, scoped, tag = 'scoped memory for tpu_custom_call.1']
    #allocation4 [shape = 's32[1]{0}', space=sflag, size = 0x4, scoped, tag = 'scoped memory for tpu_custom_call.1']
    #allocation5 [shape = 'u8[393216]{0}', space=vmem, size = 0x60000, scoped, tag = 'input window, operand 1, single buffered']
    #allocation6 [shape = 's32[1]{0}', space=sflag, size = 0x4, scoped, tag = 'scoped memory for tpu_custom_call.1']
    #allocation7 [shape = 'u8[262144]{0}', space=vmem, size = 0x40000, scoped, tag = 'input window, operand 3, single buffered']
    #allocation8 [shape = 'u8[8192]{0}', space=vmem, size = 0x2000, scoped, tag = 'output window, operand 0, single buffered']
    %10 = vsyncpa [#allocation3], 0
    %11 = vsyncpa [#allocation6], 0
    %12 = vsyncpa [#allocation4], 0
    // Predicated region
    $region2: #{tpu_custom_call.1} parent=1 // pred_check
      _
    $region3: #{tpu_custom_call.1} parent=1 // pred_check_branch
      %14 = sbr.rel (0) target = $region5
    $region4: #{tpu_custom_call.1} parent=1 // pred_region
      %s16 = ssub.s32 384, 384
      %17 = vsyncadd [#allocation3], %s16
      %s19 = sshll.u32 [#allocation2], 4
      %s20 = int_to_ptr.vmem [resolvable:$true] %s19
      %22 = dma.hbm_to_vmem [thread:$0]  %s0, 384, %s20, [#allocation3]
    $region5: #{tpu_custom_call.1} parent=1 // pred_fallthru
      _
    // Predicated region
    $region6: #{tpu_custom_call.1} parent=1 // pred_check
      _
    $region7: #{tpu_custom_call.1} parent=1 // pred_check_branch
      %24 = sbr.rel (0) target = $region9
    $region8: #{tpu_custom_call.1} parent=1 // pred_region
      %s26 = ssub.s32 12288, 12288
      %27 = vsyncadd [#allocation6], %s26
      %s28 = sshll.u32 [#allocation5], 4
      %s29 = int_to_ptr.vmem [resolvable:$true] %s28
      %34 = dma.hbm_to_vmem [thread:$0]  %s1, 12288, %s29, [#allocation6], 256, 256, 16
    $region9: #{tpu_custom_call.1} parent=1 // pred_fallthru
      _
    // Predicated region
    $region10: #{tpu_custom_call.1} parent=1 // pred_check
      _
    $region11: #{tpu_custom_call.1} parent=1 // pred_check_branch
      %36 = sbr.rel (0) target = $region13
    $region12: #{tpu_custom_call.1} parent=1 // pred_region
      _
    $region13: #{tpu_custom_call.1} parent=1 // pred_fallthru
      _
    // Predicated region
    $region14: #{tpu_custom_call.1} parent=1 // pred_check
      _
    $region15: #{tpu_custom_call.1} parent=1 // pred_check_branch
      %38 = sbr.rel (0) target = $region17
    $region16: #{tpu_custom_call.1} parent=1 // pred_region
      %s40 = ssub.s32 8192, 8192
      %41 = vsyncadd [#allocation6], %s40
      %s42 = sshll.u32 [#allocation7], 4
      %s43 = int_to_ptr.vmem [resolvable:$true] %s42
      %48 = dma.hbm_to_vmem [thread:$0]  %s3, 8192, %s43, [#allocation6], 128, 128, 8
    $region17: #{tpu_custom_call.1} parent=1 // pred_fallthru
      _
    // Predicated region
    $region18: #{tpu_custom_call.1} parent=1 // pred_check
      _
    $region19: #{tpu_custom_call.1} parent=1 // pred_check_branch
      %50 = sbr.rel (0) target = $region21
    $region20: #{tpu_custom_call.1} parent=1 // pred_region
      _
    $region21: #{tpu_custom_call.1} parent=1 // pred_fallthru
      _
    // Predicated region
    $region22: #{tpu_custom_call.1} parent=1 // pred_check
      _
    $region23: #{tpu_custom_call.1} parent=1 // pred_check_branch
      %52 = sbr.rel (0) target = $region25
    $region24: #{tpu_custom_call.1} parent=1 // pred_region
      %53 = dma.done [#allocation3], 384
    $region25: #{tpu_custom_call.1} parent=1 // pred_fallthru
      _
    // Predicated region
    $region26: #{tpu_custom_call.1} parent=1 // pred_check
      _
    $region27: #{tpu_custom_call.1} parent=1 // pred_check_branch
      %55 = sbr.rel (0) target = $region29
    $region28: #{tpu_custom_call.1} parent=1 // pred_region
      %56 = dma.done [#allocation6], 12288
    $region29: #{tpu_custom_call.1} parent=1 // pred_fallthru
      _
    // Predicated region
    $region30: #{tpu_custom_call.1} parent=1 // pred_check
      _
    $region31: #{tpu_custom_call.1} parent=1 // pred_check_branch
      %58 = sbr.rel (0) target = $region33
    $region32: #{tpu_custom_call.1} parent=1 // pred_region
      %59 = dma.done [#allocation6], 8192
    $region33: #{tpu_custom_call.1} parent=1 // pred_fallthru
      _
    %v61 = vld [vmem:[#allocation2] sm:$0xff]
    %v62 = vld [vmem:[#allocation2 + $0x8] sm:$0xff]
    %v63 = vld [vmem:[#allocation2 + $0x10] sm:$0xff]
    %v64 = vpack.c.bf16 %v61, %v61
    %v65 = vpack.c.bf16 %v62, %v62
    %v66 = vpack.c.bf16 %v63, %v63
    %v67 = vld [vmem:[#allocation5] sm:$0xff]
    %v68 = vld [vmem:[#allocation5 + $0x8] sm:$0xff]
    %v69 = vld [vmem:[#allocation5 + $0x10] sm:$0xff]
    %v70 = vld [vmem:[#allocation5 + $0x18] sm:$0xff]
    %v71 = vld [vmem:[#allocation5 + $0x20] sm:$0xff]
    %v72 = vld [vmem:[#allocation5 + $0x28] sm:$0xff]
    %v73 = vld [vmem:[#allocation5 + $0x30] sm:$0xff]
    %v74 = vld [vmem:[#allocation5 + $0x38] sm:$0xff]
    %v75 = vld [vmem:[#allocation5 + $0x40] sm:$0xff]
    %v76 = vld [vmem:[#allocation5 + $0x48] sm:$0xff]
    %v77 = vld [vmem:[#allocation5 + $0x50] sm:$0xff]
    %v78 = vld [vmem:[#allocation5 + $0x58] sm:$0xff]
    %v79 = vld [vmem:[#allocation5 + $0x60] sm:$0xff]
    %v80 = vld [vmem:[#allocation5 + $0x68] sm:$0xff]
    %v81 = vld [vmem:[#allocation5 + $0x70] sm:$0xff]
    %v82 = vld [vmem:[#allocation5 + $0x78] sm:$0xff]
    %v83 = vld [vmem:[#allocation5 + $0x80] sm:$0xff]
    %v84 = vld [vmem:[#allocation5 + $0x88] sm:$0xff]
    %v85 = vld [vmem:[#allocation5 + $0x90] sm:$0xff]
    %v86 = vld [vmem:[#allocation5 + $0x98] sm:$0xff]
    %v87 = vld [vmem:[#allocation5 + $0xa0] sm:$0xff]
    %v88 = vld [vmem:[#allocation5 + $0xa8] sm:$0xff]
    %v89 = vld [vmem:[#allocation5 + $0xb0] sm:$0xff]
    %v90 = vld [vmem:[#allocation5 + $0xb8] sm:$0xff]
    %v91 = vld [vmem:[#allocation5 + $0xc0] sm:$0xff]
    %v92 = vld [vmem:[#allocation5 + $0xc8] sm:$0xff]
    %v93 = vld [vmem:[#allocation5 + $0xd0] sm:$0xff]
    %v94 = vld [vmem:[#allocation5 + $0xd8] sm:$0xff]
    %v95 = vld [vmem:[#allocation5 + $0xe0] sm:$0xff]
    %v96 = vld [vmem:[#allocation5 + $0xe8] sm:$0xff]
    %v97 = vld [vmem:[#allocation5 + $0xf0] sm:$0xff]
    %v98 = vld [vmem:[#allocation5 + $0xf8] sm:$0xff]
    %v99 = vld [vmem:[#allocation5 + $0x100] sm:$0xff]
    %v100 = vld [vmem:[#allocation5 + $0x108] sm:$0xff]
    %v101 = vld [vmem:[#allocation5 + $0x110] sm:$0xff]
    %v102 = vld [vmem:[#allocation5 + $0x118] sm:$0xff]
    %v103 = vld [vmem:[#allocation5 + $0x120] sm:$0xff]
    %v104 = vld [vmem:[#allocation5 + $0x128] sm:$0xff]
    %v105 = vld [vmem:[#allocation5 + $0x130] sm:$0xff]
    %v106 = vld [vmem:[#allocation5 + $0x138] sm:$0xff]
    %v107 = vld [vmem:[#allocation5 + $0x140] sm:$0xff]
    %v108 = vld [vmem:[#allocation5 + $0x148] sm:$0xff]
    %v109 = vld [vmem:[#allocation5 + $0x150] sm:$0xff]
    %v110 = vld [vmem:[#allocation5 + $0x158] sm:$0xff]
    %v111 = vld [vmem:[#allocation5 + $0x160] sm:$0xff]
    %v112 = vld [vmem:[#allocation5 + $0x168] sm:$0xff]
    %v113 = vld [vmem:[#allocation5 + $0x170] sm:$0xff]
    %v114 = vld [vmem:[#allocation5 + $0x178] sm:$0xff]
    %v115 = vld [vmem:[#allocation5 + $0x180] sm:$0xff]
    %v116 = vld [vmem:[#allocation5 + $0x188] sm:$0xff]
    %v117 = vld [vmem:[#allocation5 + $0x190] sm:$0xff]
    %v118 = vld [vmem:[#allocation5 + $0x198] sm:$0xff]
    %v119 = vld [vmem:[#allocation5 + $0x1a0] sm:$0xff]
    %v120 = vld [vmem:[#allocation5 + $0x1a8] sm:$0xff]
    %v121 = vld [vmem:[#allocation5 + $0x1b0] sm:$0xff]
    %v122 = vld [vmem:[#allocation5 + $0x1b8] sm:$0xff]
    %v123 = vld [vmem:[#allocation5 + $0x1c0] sm:$0xff]
    %v124 = vld [vmem:[#allocation5 + $0x1c8] sm:$0xff]
    %v125 = vld [vmem:[#allocation5 + $0x1d0] sm:$0xff]
    %v126 = vld [vmem:[#allocation5 + $0x1d8] sm:$0xff]
    %v127 = vld [vmem:[#allocation5 + $0x1e0] sm:$0xff]
    %v128 = vld [vmem:[#allocation5 + $0x1e8] sm:$0xff]
    %v129 = vld [vmem:[#allocation5 + $0x1f0] sm:$0xff]
    %v130 = vld [vmem:[#allocation5 + $0x1f8] sm:$0xff]
    %v131 = vld [vmem:[#allocation5 + $0x200] sm:$0xff]
    %v132 = vld [vmem:[#allocation5 + $0x208] sm:$0xff]
    %v133 = vld [vmem:[#allocation5 + $0x210] sm:$0xff]
    %v134 = vld [vmem:[#allocation5 + $0x218] sm:$0xff]
    %v135 = vld [vmem:[#allocation5 + $0x220] sm:$0xff]
    %v136 = vld [vmem:[#allocation5 + $0x228] sm:$0xff]
    %v137 = vld [vmem:[#allocation5 + $0x230] sm:$0xff]
    %v138 = vld [vmem:[#allocation5 + $0x238] sm:$0xff]
    %v139 = vld [vmem:[#allocation5 + $0x240] sm:$0xff]
    %v140 = vld [vmem:[#allocation5 + $0x248] sm:$0xff]
    %v141 = vld [vmem:[#allocation5 + $0x250] sm:$0xff]
    %v142 = vld [vmem:[#allocation5 + $0x258] sm:$0xff]
    %v143 = vld [vmem:[#allocation5 + $0x260] sm:$0xff]
    %v144 = vld [vmem:[#allocation5 + $0x268] sm:$0xff]
    %v145 = vld [vmem:[#allocation5 + $0x270] sm:$0xff]
    %v146 = vld [vmem:[#allocation5 + $0x278] sm:$0xff]
    %v147 = vld [vmem:[#allocation5 + $0x280] sm:$0xff]
    %v148 = vld [vmem:[#allocation5 + $0x288] sm:$0xff]
    %v149 = vld [vmem:[#allocation5 + $0x290] sm:$0xff]
    %v150 = vld [vmem:[#allocation5 + $0x298] sm:$0xff]
    %v151 = vld [vmem:[#allocation5 + $0x2a0] sm:$0xff]
    %v152 = vld [vmem:[#allocation5 + $0x2a8] sm:$0xff]
    %v153 = vld [vmem:[#allocation5 + $0x2b0] sm:$0xff]
    %v154 = vld [vmem:[#allocation5 + $0x2b8] sm:$0xff]
    %v155 = vld [vmem:[#allocation5 + $0x2c0] sm:$0xff]
    %v156 = vld [vmem:[#allocation5 + $0x2c8] sm:$0xff]
    %v157 = vld [vmem:[#allocation5 + $0x2d0] sm:$0xff]
    %v158 = vld [vmem:[#allocation5 + $0x2d8] sm:$0xff]
    %v159 = vld [vmem:[#allocation5 + $0x2e0] sm:$0xff]
    %v160 = vld [vmem:[#allocation5 + $0x2e8] sm:$0xff]
    %v161 = vld [vmem:[#allocation5 + $0x2f0] sm:$0xff]
    %v162 = vld [vmem:[#allocation5 + $0x2f8] sm:$0xff]
    %v163 = vld [vmem:[%s2] sm:$0xf]
    %v165 = vlaneseq
    %v166 = vshrl.u32 %v165, 7
    %v167 = vsub.s32 0, %v166
    %v168 = vrot.slane %v163, %v167
    %v169 = vlaneseq
    %v170 = vshrl.u32 %v169, 7
    %v171 = vsub.s32 1, %v170
    %v172 = vrot.slane %v163, %v171
    %v173 = vlaneseq
    %v174 = vshrl.u32 %v173, 7
    %v175 = vsub.s32 2, %v174
    %v176 = vrot.slane %v163, %v175
    %v177 = vlaneseq
    %v178 = vshrl.u32 %v177, 7
    %v179 = vsub.s32 3, %v178
    %v180 = vrot.slane %v163, %v179
    %v281 = vunpack.c.l.b16 %v67
    %v282 = vunpack.c.h.b16 %v67
    %v283 = vunpack.c.l.b16 %v68
    %v284 = vunpack.c.h.b16 %v68
    %v285 = vunpack.c.l.b16 %v69
    %v286 = vunpack.c.h.b16 %v69
    %v287 = vunpack.c.l.b16 %v70
    %v288 = vunpack.c.h.b16 %v70
    %v289 = vunpack.c.l.b16 %v71
    %v290 = vunpack.c.h.b16 %v71
    %v291 = vunpack.c.l.b16 %v72
    %v292 = vunpack.c.h.b16 %v72
    %v293 = vunpack.c.l.b16 %v73
    %v294 = vunpack.c.h.b16 %v73
    %v295 = vunpack.c.l.b16 %v74
    %v296 = vunpack.c.h.b16 %v74
    %v297 = vunpack.c.l.b16 %v75
    %v298 = vunpack.c.h.b16 %v75
    %v299 = vunpack.c.l.b16 %v76
    %v300 = vunpack.c.h.b16 %v76
    %v301 = vunpack.c.l.b16 %v77
    %v302 = vunpack.c.h.b16 %v77
    %v303 = vunpack.c.l.b16 %v78
    %v304 = vunpack.c.h.b16 %v78
    %v305 = vunpack.c.l.b16 %v79
    %v306 = vunpack.c.h.b16 %v79
    %v307 = vunpack.c.l.b16 %v80
    %v308 = vunpack.c.h.b16 %v80
    %v309 = vunpack.c.l.b16 %v81
    %v310 = vunpack.c.h.b16 %v81
    %v311 = vunpack.c.l.b16 %v82
    %v312 = vunpack.c.h.b16 %v82
    %v313 = vunpack.c.l.b16 %v83
    %v314 = vunpack.c.h.b16 %v83
    %v315 = vunpack.c.l.b16 %v84
    %v316 = vunpack.c.h.b16 %v84
    %v317 = vunpack.c.l.b16 %v85
    %v318 = vunpack.c.h.b16 %v85
    %v319 = vunpack.c.l.b16 %v86
    %v320 = vunpack.c.h.b16 %v86
    %v321 = vunpack.c.l.b16 %v87
    %v322 = vunpack.c.h.b16 %v87
    %v323 = vunpack.c.l.b16 %v88
    %v324 = vunpack.c.h.b16 %v88
    %v325 = vunpack.c.l.b16 %v89
    %v326 = vunpack.c.h.b16 %v89
    %v327 = vunpack.c.l.b16 %v90
    %v328 = vunpack.c.h.b16 %v90
    %v329 = vunpack.c.l.b16 %v91
    %v330 = vunpack.c.h.b16 %v91
    %v331 = vunpack.c.l.b16 %v92
    %v332 = vunpack.c.h.b16 %v92
    %v333 = vunpack.c.l.b16 %v93
    %v334 = vunpack.c.h.b16 %v93
    %v335 = vunpack.c.l.b16 %v94
    %v336 = vunpack.c.h.b16 %v94
    %v337 = vunpack.c.l.b16 %v95
    %v338 = vunpack.c.h.b16 %v95
    %v339 = vunpack.c.l.b16 %v96
    %v340 = vunpack.c.h.b16 %v96
    %v341 = vunpack.c.l.b16 %v97
    %v342 = vunpack.c.h.b16 %v97
    %v343 = vunpack.c.l.b16 %v98
    %v344 = vunpack.c.h.b16 %v98
    %v345 = vunpack.c.l.b16 %v99
    %v346 = vunpack.c.h.b16 %v99
    %v347 = vunpack.c.l.b16 %v100
    %v348 = vunpack.c.h.b16 %v100
    %v349 = vunpack.c.l.b16 %v101
    %v350 = vunpack.c.h.b16 %v101
    %v351 = vunpack.c.l.b16 %v102
    %v352 = vunpack.c.h.b16 %v102
    %v353 = vunpack.c.l.b16 %v103
    %v354 = vunpack.c.h.b16 %v103
    %v355 = vunpack.c.l.b16 %v104
    %v356 = vunpack.c.h.b16 %v104
    %v357 = vunpack.c.l.b16 %v105
    %v358 = vunpack.c.h.b16 %v105
    %v359 = vunpack.c.l.b16 %v106
    %v360 = vunpack.c.h.b16 %v106
    %v361 = vunpack.c.l.b16 %v107
    %v362 = vunpack.c.h.b16 %v107
    %v363 = vunpack.c.l.b16 %v108
    %v364 = vunpack.c.h.b16 %v108
    %v365 = vunpack.c.l.b16 %v109
    %v366 = vunpack.c.h.b16 %v109
    %v367 = vunpack.c.l.b16 %v110
    %v368 = vunpack.c.h.b16 %v110
    %v369 = vunpack.c.l.b16 %v111
    %v370 = vunpack.c.h.b16 %v111
    %v371 = vunpack.c.l.b16 %v112
    %v372 = vunpack.c.h.b16 %v112
    %v373 = vunpack.c.l.b16 %v113
    %v374 = vunpack.c.h.b16 %v113
    %v375 = vunpack.c.l.b16 %v114
    %v376 = vunpack.c.h.b16 %v114
    %v377 = vunpack.c.l.b16 %v115
    %v378 = vunpack.c.h.b16 %v115
    %v379 = vunpack.c.l.b16 %v116
    %v380 = vunpack.c.h.b16 %v116
    %v381 = vunpack.c.l.b16 %v117
    %v382 = vunpack.c.h.b16 %v117
    %v383 = vunpack.c.l.b16 %v118
    %v384 = vunpack.c.h.b16 %v118
    %v385 = vunpack.c.l.b16 %v119
    %v386 = vunpack.c.h.b16 %v119
    %v387 = vunpack.c.l.b16 %v120
    %v388 = vunpack.c.h.b16 %v120
    %v389 = vunpack.c.l.b16 %v121
    %v390 = vunpack.c.h.b16 %v121
    %v391 = vunpack.c.l.b16 %v122
    %v392 = vunpack.c.h.b16 %v122
    %v393 = vunpack.c.l.b16 %v123
    %v394 = vunpack.c.h.b16 %v123
    %v395 = vunpack.c.l.b16 %v124
    %v396 = vunpack.c.h.b16 %v124
    %v397 = vunpack.c.l.b16 %v125
    %v398 = vunpack.c.h.b16 %v125
    %v399 = vunpack.c.l.b16 %v126
    %v400 = vunpack.c.h.b16 %v126
    %v401 = vunpack.c.l.b16 %v127
    %v402 = vunpack.c.h.b16 %v127
    %v403 = vunpack.c.l.b16 %v128
    %v404 = vunpack.c.h.b16 %v128
    %v405 = vunpack.c.l.b16 %v129
    %v406 = vunpack.c.h.b16 %v129
    %v407 = vunpack.c.l.b16 %v130
    %v408 = vunpack.c.h.b16 %v130
    %v409 = vunpack.c.l.b16 %v131
    %v410 = vunpack.c.h.b16 %v131
    %v411 = vunpack.c.l.b16 %v132
    %v412 = vunpack.c.h.b16 %v132
    %v413 = vunpack.c.l.b16 %v133
    %v414 = vunpack.c.h.b16 %v133
    %v415 = vunpack.c.l.b16 %v134
    %v416 = vunpack.c.h.b16 %v134
    %v417 = vunpack.c.l.b16 %v135
    %v418 = vunpack.c.h.b16 %v135
    %v419 = vunpack.c.l.b16 %v136
    %v420 = vunpack.c.h.b16 %v136
    %v421 = vunpack.c.l.b16 %v137
    %v422 = vunpack.c.h.b16 %v137
    %v423 = vunpack.c.l.b16 %v138
    %v424 = vunpack.c.h.b16 %v138
    %v425 = vunpack.c.l.b16 %v139
    %v426 = vunpack.c.h.b16 %v139
    %v427 = vunpack.c.l.b16 %v140
    %v428 = vunpack.c.h.b16 %v140
    %v429 = vunpack.c.l.b16 %v141
    %v430 = vunpack.c.h.b16 %v141
    %v431 = vunpack.c.l.b16 %v142
    %v432 = vunpack.c.h.b16 %v142
    %v433 = vunpack.c.l.b16 %v143
    %v434 = vunpack.c.h.b16 %v143
    %v435 = vunpack.c.l.b16 %v144
    %v436 = vunpack.c.h.b16 %v144
    %v437 = vunpack.c.l.b16 %v145
    %v438 = vunpack.c.h.b16 %v145
    %v439 = vunpack.c.l.b16 %v146
    %v440 = vunpack.c.h.b16 %v146
    %v441 = vunpack.c.l.b16 %v147
    %v442 = vunpack.c.h.b16 %v147
    %v443 = vunpack.c.l.b16 %v148
    %v444 = vunpack.c.h.b16 %v148
    %v445 = vunpack.c.l.b16 %v149
    %v446 = vunpack.c.h.b16 %v149
    %v447 = vunpack.c.l.b16 %v150
    %v448 = vunpack.c.h.b16 %v150
    %v449 = vunpack.c.l.b16 %v151
    %v450 = vunpack.c.h.b16 %v151
    %v451 = vunpack.c.l.b16 %v152
    %v452 = vunpack.c.h.b16 %v152
    %v453 = vunpack.c.l.b16 %v153
    %v454 = vunpack.c.h.b16 %v153
    %v455 = vunpack.c.l.b16 %v154
    %v456 = vunpack.c.h.b16 %v154
    %v457 = vunpack.c.l.b16 %v155
    %v458 = vunpack.c.h.b16 %v155
    %v459 = vunpack.c.l.b16 %v156
    %v460 = vunpack.c.h.b16 %v156
    %v461 = vunpack.c.l.b16 %v157
    %v462 = vunpack.c.h.b16 %v157
    %v463 = vunpack.c.l.b16 %v158
    %v464 = vunpack.c.h.b16 %v158
    %v465 = vunpack.c.l.b16 %v159
    %v466 = vunpack.c.h.b16 %v159
    %v467 = vunpack.c.l.b16 %v160
    %v468 = vunpack.c.h.b16 %v160
    %v469 = vunpack.c.l.b16 %v161
    %v470 = vunpack.c.h.b16 %v161
    %v471 = vunpack.c.l.b16 %v162
    %v472 = vunpack.c.h.b16 %v162
    %v473 = vpack.c.b16 %v285, %v281
    %v474 = vpack.c.b16 %v286, %v282
    %v475 = vpack.c.b16 %v287, %v283
    %v476 = vpack.c.b16 %v288, %v284
    %v477 = vpack.c.b16 %v293, %v289
    %v478 = vpack.c.b16 %v294, %v290
    %v479 = vpack.c.b16 %v295, %v291
    %v480 = vpack.c.b16 %v296, %v292
    %v481 = vpack.c.b16 %v301, %v297
    %v482 = vpack.c.b16 %v302, %v298
    %v483 = vpack.c.b16 %v303, %v299
    %v484 = vpack.c.b16 %v304, %v300
    %v485 = vpack.c.b16 %v309, %v305
    %v486 = vpack.c.b16 %v310, %v306
    %v487 = vpack.c.b16 %v311, %v307
    %v488 = vpack.c.b16 %v312, %v308
    %v489 = vpack.c.b16 %v317, %v313
    %v490 = vpack.c.b16 %v318, %v314
    %v491 = vpack.c.b16 %v319, %v315
    %v492 = vpack.c.b16 %v320, %v316
    %v493 = vpack.c.b16 %v325, %v321
    %v494 = vpack.c.b16 %v326, %v322
    %v495 = vpack.c.b16 %v327, %v323
    %v496 = vpack.c.b16 %v328, %v324
    %v497 = vpack.c.b16 %v333, %v329
    %v498 = vpack.c.b16 %v334, %v330
    %v499 = vpack.c.b16 %v335, %v331
    %v500 = vpack.c.b16 %v336, %v332
    %v501 = vpack.c.b16 %v341, %v337
    %v502 = vpack.c.b16 %v342, %v338
    %v503 = vpack.c.b16 %v343, %v339
    %v504 = vpack.c.b16 %v344, %v340
    %v505 = vpack.c.b16 %v349, %v345
    %v506 = vpack.c.b16 %v350, %v346
    %v507 = vpack.c.b16 %v351, %v347
    %v508 = vpack.c.b16 %v352, %v348
    %v509 = vpack.c.b16 %v357, %v353
    %v510 = vpack.c.b16 %v358, %v354
    %v511 = vpack.c.b16 %v359, %v355
    %v512 = vpack.c.b16 %v360, %v356
    %v513 = vpack.c.b16 %v365, %v361
    %v514 = vpack.c.b16 %v366, %v362
    %v515 = vpack.c.b16 %v367, %v363
    %v516 = vpack.c.b16 %v368, %v364
    %v517 = vpack.c.b16 %v373, %v369
    %v518 = vpack.c.b16 %v374, %v370
    %v519 = vpack.c.b16 %v375, %v371
    %v520 = vpack.c.b16 %v376, %v372
    %v521 = vpack.c.b16 %v381, %v377
    %v522 = vpack.c.b16 %v382, %v378
    %v523 = vpack.c.b16 %v383, %v379
    %v524 = vpack.c.b16 %v384, %v380
    %v525 = vpack.c.b16 %v389, %v385
    %v526 = vpack.c.b16 %v390, %v386
    %v527 = vpack.c.b16 %v391, %v387
    %v528 = vpack.c.b16 %v392, %v388
    %v529 = vpack.c.b16 %v397, %v393
    %v530 = vpack.c.b16 %v398, %v394
    %v531 = vpack.c.b16 %v399, %v395
    %v532 = vpack.c.b16 %v400, %v396
    %v533 = vpack.c.b16 %v405, %v401
    %v534 = vpack.c.b16 %v406, %v402
    %v535 = vpack.c.b16 %v407, %v403
    %v536 = vpack.c.b16 %v408, %v404
    %v537 = vpack.c.b16 %v413, %v409
    %v538 = vpack.c.b16 %v414, %v410
    %v539 = vpack.c.b16 %v415, %v411
    %v540 = vpack.c.b16 %v416, %v412
    %v541 = vpack.c.b16 %v421, %v417
    %v542 = vpack.c.b16 %v422, %v418
    %v543 = vpack.c.b16 %v423, %v419
    %v544 = vpack.c.b16 %v424, %v420
    %v545 = vpack.c.b16 %v429, %v425
    %v546 = vpack.c.b16 %v430, %v426
    %v547 = vpack.c.b16 %v431, %v427
    %v548 = vpack.c.b16 %v432, %v428
    %v549 = vpack.c.b16 %v437, %v433
    %v550 = vpack.c.b16 %v438, %v434
    %v551 = vpack.c.b16 %v439, %v435
    %v552 = vpack.c.b16 %v440, %v436
    %v553 = vpack.c.b16 %v445, %v441
    %v554 = vpack.c.b16 %v446, %v442
    %v555 = vpack.c.b16 %v447, %v443
    %v556 = vpack.c.b16 %v448, %v444
    %v557 = vpack.c.b16 %v453, %v449
    %v558 = vpack.c.b16 %v454, %v450
    %v559 = vpack.c.b16 %v455, %v451
    %v560 = vpack.c.b16 %v456, %v452
    %v561 = vpack.c.b16 %v461, %v457
    %v562 = vpack.c.b16 %v462, %v458
    %v563 = vpack.c.b16 %v463, %v459
    %v564 = vpack.c.b16 %v464, %v460
    %v565 = vpack.c.b16 %v469, %v465
    %v566 = vpack.c.b16 %v470, %v466
    %v567 = vpack.c.b16 %v471, %v467
    %v568 = vpack.c.b16 %v472, %v468
    %665 = vmatprep.subr.bf16.mxu0 %v474
    %666 = vmatpush1.bf16.msra.mxu0 %v473
    %667 = vmatprep.subr.bf16.mxu0 %v478
    %668 = vmatpush1.bf16.msra.mxu0 %v477
    %669 = vmatprep.subr.bf16.mxu0 %v482
    %670 = vmatpush1.bf16.msra.mxu0 %v481
    %671 = vmatprep.subr.bf16.mxu0 %v486
    %672 = vmatpush1.bf16.msra.mxu0 %v485
    %673 = vmatprep.subr.bf16.mxu0 %v490
    %674 = vmatpush1.bf16.msra.mxu0 %v489
    %675 = vmatprep.subr.bf16.mxu0 %v494
    %676 = vmatpush1.bf16.msra.mxu0 %v493
    %677 = vmatprep.subr.bf16.mxu0 %v498
    %678 = vmatpush1.bf16.msra.mxu0 %v497
    %679 = vmatprep.subr.bf16.mxu0 %v502
    %680 = vmatpush1.bf16.msra.mxu0 %v501
    %681 = vmatprep.subr.bf16.mxu0 %v506
    %682 = vmatpush1.bf16.msra.mxu0 %v505
    %683 = vmatprep.subr.bf16.mxu0 %v510
    %684 = vmatpush1.bf16.msra.mxu0 %v509
    %685 = vmatprep.subr.bf16.mxu0 %v514
    %686 = vmatpush1.bf16.msra.mxu0 %v513
    %687 = vmatprep.subr.bf16.mxu0 %v518
    %688 = vmatpush1.bf16.msra.mxu0 %v517
    %689 = vmatprep.subr.bf16.mxu0 %v522
    %690 = vmatpush1.bf16.msra.mxu0 %v521
    %691 = vmatprep.subr.bf16.mxu0 %v526
    %692 = vmatpush1.bf16.msra.mxu0 %v525
    %693 = vmatprep.subr.bf16.mxu0 %v530
    %694 = vmatpush1.bf16.msra.mxu0 %v529
    %695 = vmatprep.subr.bf16.mxu0 %v534
    %696 = vmatpush1.bf16.msra.mxu0 %v533
    %697 = vmatprep.mubr.bf16.mxu0 %v65
    %698 = vmatmul.mubr.bf16.gmra.mrb[0].mxu0 %v64
    %v699 = vpop.f32.mrb[0].mxu0
    %v700 = vadd.f32 %v168, %v699
    %v701 = vpop.f32.mrb[0].mxu0
    %v702 = vadd.f32 %v172, %v701
    %v703 = vpop.f32.mrb[0].mxu0
    %v704 = vpop.f32.mrb[0].mxu0
    %705 = vdwg.mxu0
    %706 = vmatprep.subr.bf16.mxu0 %v538
    %707 = vmatpush1.bf16.msra.mxu0 %v537
    %708 = vmatprep.subr.bf16.mxu0 %v542
    %709 = vmatpush1.bf16.msra.mxu0 %v541
    %710 = vmatprep.subr.bf16.mxu0 %v546
    %711 = vmatpush1.bf16.msra.mxu0 %v545
    %712 = vmatprep.subr.bf16.mxu0 %v550
    %713 = vmatpush1.bf16.msra.mxu0 %v549
    %714 = vmatprep.subr.bf16.mxu0 %v554
    %715 = vmatpush1.bf16.msra.mxu0 %v553
    %716 = vmatprep.subr.bf16.mxu0 %v558
    %717 = vmatpush1.bf16.msra.mxu0 %v557
    %718 = vmatprep.subr.bf16.mxu0 %v562
    %719 = vmatpush1.bf16.msra.mxu0 %v561
    %720 = vmatprep.subr.bf16.mxu0 %v566
    %721 = vmatpush1.bf16.msra.mxu0 %v565
    %722 = vmatprep.subr.bf16.mxu0 0
    %723 = vmatpush1.bf16.msra.mxu0 0
    %724 = vmatprep.subr.bf16.mxu0 0
    %725 = vmatpush1.bf16.msra.mxu0 0
    %726 = vmatprep.subr.bf16.mxu0 0
    %727 = vmatpush1.bf16.msra.mxu0 0
    %728 = vmatprep.subr.bf16.mxu0 0
    %729 = vmatpush1.bf16.msra.mxu0 0
    %730 = vmatprep.subr.bf16.mxu0 0
    %731 = vmatpush1.bf16.msra.mxu0 0
    %732 = vmatprep.subr.bf16.mxu0 0
    %733 = vmatpush1.bf16.msra.mxu0 0
    %734 = vmatprep.subr.bf16.mxu0 0
    %735 = vmatpush1.bf16.msra.mxu0 0
    %736 = vmatprep.subr.bf16.mxu0 0
    %737 = vmatpush1.bf16.msra.mxu0 0
    %738 = vmatprep.mubr.bf16.mxu0 0
    %739 = vmatmul.mubr.bf16.gmra.mrb[0].mxu0 %v66
    %v740 = vpop.f32.mrb[0].mxu0
    %v741 = vadd.f32 %v700, %v740
    %v742 = vpop.f32.mrb[0].mxu0
    %v743 = vadd.f32 %v702, %v742
    %v744 = vpop.f32.mrb[0].mxu0
    %v745 = vpop.f32.mrb[0].mxu0
    %746 = vdwg.mxu0
    %747 = vmatprep.subr.bf16.mxu0 %v476
    %748 = vmatpush1.bf16.msra.mxu0 %v475
    %749 = vmatprep.subr.bf16.mxu0 %v480
    %750 = vmatpush1.bf16.msra.mxu0 %v479
    %751 = vmatprep.subr.bf16.mxu0 %v484
    %752 = vmatpush1.bf16.msra.mxu0 %v483
    %753 = vmatprep.subr.bf16.mxu0 %v488
    %754 = vmatpush1.bf16.msra.mxu0 %v487
    %755 = vmatprep.subr.bf16.mxu0 %v492
    %756 = vmatpush1.bf16.msra.mxu0 %v491
    %757 = vmatprep.subr.bf16.mxu0 %v496
    %758 = vmatpush1.bf16.msra.mxu0 %v495
    %759 = vmatprep.subr.bf16.mxu0 %v500
    %760 = vmatpush1.bf16.msra.mxu0 %v499
    %761 = vmatprep.subr.bf16.mxu0 %v504
    %762 = vmatpush1.bf16.msra.mxu0 %v503
    %763 = vmatprep.subr.bf16.mxu0 %v508
    %764 = vmatpush1.bf16.msra.mxu0 %v507
    %765 = vmatprep.subr.bf16.mxu0 %v512
    %766 = vmatpush1.bf16.msra.mxu0 %v511
    %767 = vmatprep.subr.bf16.mxu0 %v516
    %768 = vmatpush1.bf16.msra.mxu0 %v515
    %769 = vmatprep.subr.bf16.mxu0 %v520
    %770 = vmatpush1.bf16.msra.mxu0 %v519
    %771 = vmatprep.subr.bf16.mxu0 %v524
    %772 = vmatpush1.bf16.msra.mxu0 %v523
    %773 = vmatprep.subr.bf16.mxu0 %v528
    %774 = vmatpush1.bf16.msra.mxu0 %v527
    %775 = vmatprep.subr.bf16.mxu0 %v532
    %776 = vmatpush1.bf16.msra.mxu0 %v531
    %777 = vmatprep.subr.bf16.mxu0 %v536
    %778 = vmatpush1.bf16.msra.mxu0 %v535
    %779 = vmatprep.mubr.bf16.mxu0 %v65
    %780 = vmatmul.mubr.bf16.gmra.mrb[0].mxu0 %v64
    %v781 = vpop.f32.mrb[0].mxu0
    %v782 = vadd.f32 %v176, %v781
    %v783 = vpop.f32.mrb[0].mxu0
    %v784 = vadd.f32 %v180, %v783
    %v785 = vpop.f32.mrb[0].mxu0
    %v786 = vpop.f32.mrb[0].mxu0
    %787 = vdwg.mxu0
    %788 = vmatprep.subr.bf16.mxu0 %v540
    %789 = vmatpush1.bf16.msra.mxu0 %v539
    %790 = vmatprep.subr.bf16.mxu0 %v544
    %791 = vmatpush1.bf16.msra.mxu0 %v543
    %792 = vmatprep.subr.bf16.mxu0 %v548
    %793 = vmatpush1.bf16.msra.mxu0 %v547
    %794 = vmatprep.subr.bf16.mxu0 %v552
    %795 = vmatpush1.bf16.msra.mxu0 %v551
    %796 = vmatprep.subr.bf16.mxu0 %v556
    %797 = vmatpush1.bf16.msra.mxu0 %v555
    %798 = vmatprep.subr.bf16.mxu0 %v560
    %799 = vmatpush1.bf16.msra.mxu0 %v559
    %800 = vmatprep.subr.bf16.mxu0 %v564
    %801 = vmatpush1.bf16.msra.mxu0 %v563
    %802 = vmatprep.subr.bf16.mxu0 %v568
    %803 = vmatpush1.bf16.msra.mxu0 %v567
    %804 = vmatprep.subr.bf16.mxu0 0
    %805 = vmatpush1.bf16.msra.mxu0 0
    %806 = vmatprep.subr.bf16.mxu0 0
    %807 = vmatpush1.bf16.msra.mxu0 0
    %808 = vmatprep.subr.bf16.mxu0 0
    %809 = vmatpush1.bf16.msra.mxu0 0
    %810 = vmatprep.subr.bf16.mxu0 0
    %811 = vmatpush1.bf16.msra.mxu0 0
    %812 = vmatprep.subr.bf16.mxu0 0
    %813 = vmatpush1.bf16.msra.mxu0 0
    %814 = vmatprep.subr.bf16.mxu0 0
    %815 = vmatpush1.bf16.msra.mxu0 0
    %816 = vmatprep.subr.bf16.mxu0 0
    %817 = vmatpush1.bf16.msra.mxu0 0
    %818 = vmatprep.subr.bf16.mxu0 0
    %819 = vmatpush1.bf16.msra.mxu0 0
    %820 = vmatprep.mubr.bf16.mxu0 0
    %821 = vmatmul.mubr.bf16.gmra.mrb[0].mxu0 %v66
    %v822 = vpop.f32.mrb[0].mxu0
    %v823 = vadd.f32 %v782, %v822
    %v824 = vpop.f32.mrb[0].mxu0
    %v825 = vadd.f32 %v784, %v824
    %v826 = vpop.f32.mrb[0].mxu0
    %v827 = vpop.f32.mrb[0].mxu0
    %828 = vdwg.mxu0
    %v829 = vmax.f32 %v741, 0.0
    %v830 = vmax.f32 %v743, 0.0
    %v831 = vmax.f32 %v823, 0.0
    %v832 = vmax.f32 %v825, 0.0
    %v833 = vpack.c.bf16 %v829, %v829
    %v834 = vpack.c.bf16 %v830, %v830
    %v835 = vpack.c.bf16 %v831, %v831
    %v836 = vpack.c.bf16 %v832, %v832
    %v837 = vld [vmem:[#allocation7] sm:$0xff]
    %v838 = vld [vmem:[#allocation7 + $0x8] sm:$0xff]
    %v839 = vld [vmem:[#allocation7 + $0x10] sm:$0xff]
    %v840 = vld [vmem:[#allocation7 + $0x18] sm:$0xff]
    %v841 = vld [vmem:[#allocation7 + $0x20] sm:$0xff]
    %v842 = vld [vmem:[#allocation7 + $0x28] sm:$0xff]
    %v843 = vld [vmem:[#allocation7 + $0x30] sm:$0xff]
    %v844 = vld [vmem:[#allocation7 + $0x38] sm:$0xff]
    %v845 = vld [vmem:[#allocation7 + $0x40] sm:$0xff]
    %v846 = vld [vmem:[#allocation7 + $0x48] sm:$0xff]
    %v847 = vld [vmem:[#allocation7 + $0x50] sm:$0xff]
    %v848 = vld [vmem:[#allocation7 + $0x58] sm:$0xff]
    %v849 = vld [vmem:[#allocation7 + $0x60] sm:$0xff]
    %v850 = vld [vmem:[#allocation7 + $0x68] sm:$0xff]
    %v851 = vld [vmem:[#allocation7 + $0x70] sm:$0xff]
    %v852 = vld [vmem:[#allocation7 + $0x78] sm:$0xff]
    %v853 = vld [vmem:[#allocation7 + $0x80] sm:$0xff]
    %v854 = vld [vmem:[#allocation7 + $0x88] sm:$0xff]
    %v855 = vld [vmem:[#allocation7 + $0x90] sm:$0xff]
    %v856 = vld [vmem:[#allocation7 + $0x98] sm:$0xff]
    %v857 = vld [vmem:[#allocation7 + $0xa0] sm:$0xff]
    %v858 = vld [vmem:[#allocation7 + $0xa8] sm:$0xff]
    %v859 = vld [vmem:[#allocation7 + $0xb0] sm:$0xff]
    %v860 = vld [vmem:[#allocation7 + $0xb8] sm:$0xff]
    %v861 = vld [vmem:[#allocation7 + $0xc0] sm:$0xff]
    %v862 = vld [vmem:[#allocation7 + $0xc8] sm:$0xff]
    %v863 = vld [vmem:[#allocation7 + $0xd0] sm:$0xff]
    %v864 = vld [vmem:[#allocation7 + $0xd8] sm:$0xff]
    %v865 = vld [vmem:[#allocation7 + $0xe0] sm:$0xff]
    %v866 = vld [vmem:[#allocation7 + $0xe8] sm:$0xff]
    %v867 = vld [vmem:[#allocation7 + $0xf0] sm:$0xff]
    %v868 = vld [vmem:[#allocation7 + $0xf8] sm:$0xff]
    %v869 = vld [vmem:[#allocation7 + $0x100] sm:$0xff]
    %v870 = vld [vmem:[#allocation7 + $0x108] sm:$0xff]
    %v871 = vld [vmem:[#allocation7 + $0x110] sm:$0xff]
    %v872 = vld [vmem:[#allocation7 + $0x118] sm:$0xff]
    %v873 = vld [vmem:[#allocation7 + $0x120] sm:$0xff]
    %v874 = vld [vmem:[#allocation7 + $0x128] sm:$0xff]
    %v875 = vld [vmem:[#allocation7 + $0x130] sm:$0xff]
    %v876 = vld [vmem:[#allocation7 + $0x138] sm:$0xff]
    %v877 = vld [vmem:[#allocation7 + $0x140] sm:$0xff]
    %v878 = vld [vmem:[#allocation7 + $0x148] sm:$0xff]
    %v879 = vld [vmem:[#allocation7 + $0x150] sm:$0xff]
    %v880 = vld [vmem:[#allocation7 + $0x158] sm:$0xff]
    %v881 = vld [vmem:[#allocation7 + $0x160] sm:$0xff]
    %v882 = vld [vmem:[#allocation7 + $0x168] sm:$0xff]
    %v883 = vld [vmem:[#allocation7 + $0x170] sm:$0xff]
    %v884 = vld [vmem:[#allocation7 + $0x178] sm:$0xff]
    %v885 = vld [vmem:[#allocation7 + $0x180] sm:$0xff]
    %v886 = vld [vmem:[#allocation7 + $0x188] sm:$0xff]
    %v887 = vld [vmem:[#allocation7 + $0x190] sm:$0xff]
    %v888 = vld [vmem:[#allocation7 + $0x198] sm:$0xff]
    %v889 = vld [vmem:[#allocation7 + $0x1a0] sm:$0xff]
    %v890 = vld [vmem:[#allocation7 + $0x1a8] sm:$0xff]
    %v891 = vld [vmem:[#allocation7 + $0x1b0] sm:$0xff]
    %v892 = vld [vmem:[#allocation7 + $0x1b8] sm:$0xff]
    %v893 = vld [vmem:[#allocation7 + $0x1c0] sm:$0xff]
    %v894 = vld [vmem:[#allocation7 + $0x1c8] sm:$0xff]
    %v895 = vld [vmem:[#allocation7 + $0x1d0] sm:$0xff]
    %v896 = vld [vmem:[#allocation7 + $0x1d8] sm:$0xff]
    %v897 = vld [vmem:[#allocation7 + $0x1e0] sm:$0xff]
    %v898 = vld [vmem:[#allocation7 + $0x1e8] sm:$0xff]
    %v899 = vld [vmem:[#allocation7 + $0x1f0] sm:$0xff]
    %v900 = vld [vmem:[#allocation7 + $0x1f8] sm:$0xff]
    %v901 = vld [vmem:[%s4] sm:$0x3]
    %v903 = vlaneseq
    %v904 = vshrl.u32 %v903, 7
    %v905 = vsub.s32 0, %v904
    %v906 = vrot.slane %v901, %v905
    %v907 = vlaneseq
    %v908 = vshrl.u32 %v907, 7
    %v909 = vsub.s32 1, %v908
    %v910 = vrot.slane %v901, %v909
    %v977 = vunpack.c.l.b16 %v837
    %v978 = vunpack.c.h.b16 %v837
    %v979 = vunpack.c.l.b16 %v838
    %v980 = vunpack.c.h.b16 %v838
    %v981 = vunpack.c.l.b16 %v839
    %v982 = vunpack.c.h.b16 %v839
    %v983 = vunpack.c.l.b16 %v840
    %v984 = vunpack.c.h.b16 %v840
    %v985 = vunpack.c.l.b16 %v841
    %v986 = vunpack.c.h.b16 %v841
    %v987 = vunpack.c.l.b16 %v842
    %v988 = vunpack.c.h.b16 %v842
    %v989 = vunpack.c.l.b16 %v843
    %v990 = vunpack.c.h.b16 %v843
    %v991 = vunpack.c.l.b16 %v844
    %v992 = vunpack.c.h.b16 %v844
    %v993 = vunpack.c.l.b16 %v845
    %v994 = vunpack.c.h.b16 %v845
    %v995 = vunpack.c.l.b16 %v846
    %v996 = vunpack.c.h.b16 %v846
    %v997 = vunpack.c.l.b16 %v847
    %v998 = vunpack.c.h.b16 %v847
    %v999 = vunpack.c.l.b16 %v848
    %v1000 = vunpack.c.h.b16 %v848
    %v1001 = vunpack.c.l.b16 %v849
    %v1002 = vunpack.c.h.b16 %v849
    %v1003 = vunpack.c.l.b16 %v850
    %v1004 = vunpack.c.h.b16 %v850
    %v1005 = vunpack.c.l.b16 %v851
    %v1006 = vunpack.c.h.b16 %v851
    %v1007 = vunpack.c.l.b16 %v852
    %v1008 = vunpack.c.h.b16 %v852
    %v1009 = vunpack.c.l.b16 %v853
    %v1010 = vunpack.c.h.b16 %v853
    %v1011 = vunpack.c.l.b16 %v854
    %v1012 = vunpack.c.h.b16 %v854
    %v1013 = vunpack.c.l.b16 %v855
    %v1014 = vunpack.c.h.b16 %v855
    %v1015 = vunpack.c.l.b16 %v856
    %v1016 = vunpack.c.h.b16 %v856
    %v1017 = vunpack.c.l.b16 %v857
    %v1018 = vunpack.c.h.b16 %v857
    %v1019 = vunpack.c.l.b16 %v858
    %v1020 = vunpack.c.h.b16 %v858
    %v1021 = vunpack.c.l.b16 %v859
    %v1022 = vunpack.c.h.b16 %v859
    %v1023 = vunpack.c.l.b16 %v860
    %v1024 = vunpack.c.h.b16 %v860
    %v1025 = vunpack.c.l.b16 %v861
    %v1026 = vunpack.c.h.b16 %v861
    %v1027 = vunpack.c.l.b16 %v862
    %v1028 = vunpack.c.h.b16 %v862
    %v1029 = vunpack.c.l.b16 %v863
    %v1030 = vunpack.c.h.b16 %v863
    %v1031 = vunpack.c.l.b16 %v864
    %v1032 = vunpack.c.h.b16 %v864
    %v1033 = vunpack.c.l.b16 %v865
    %v1034 = vunpack.c.h.b16 %v865
    %v1035 = vunpack.c.l.b16 %v866
    %v1036 = vunpack.c.h.b16 %v866
    %v1037 = vunpack.c.l.b16 %v867
    %v1038 = vunpack.c.h.b16 %v867
    %v1039 = vunpack.c.l.b16 %v868
    %v1040 = vunpack.c.h.b16 %v868
    %v1041 = vunpack.c.l.b16 %v869
    %v1042 = vunpack.c.h.b16 %v869
    %v1043 = vunpack.c.l.b16 %v870
    %v1044 = vunpack.c.h.b16 %v870
    %v1045 = vunpack.c.l.b16 %v871
    %v1046 = vunpack.c.h.b16 %v871
    %v1047 = vunpack.c.l.b16 %v872
    %v1048 = vunpack.c.h.b16 %v872
    %v1049 = vunpack.c.l.b16 %v873
    %v1050 = vunpack.c.h.b16 %v873
    %v1051 = vunpack.c.l.b16 %v874
    %v1052 = vunpack.c.h.b16 %v874
    %v1053 = vunpack.c.l.b16 %v875
    %v1054 = vunpack.c.h.b16 %v875
    %v1055 = vunpack.c.l.b16 %v876
    %v1056 = vunpack.c.h.b16 %v876
    %v1057 = vunpack.c.l.b16 %v877
    %v1058 = vunpack.c.h.b16 %v877
    %v1059 = vunpack.c.l.b16 %v878
    %v1060 = vunpack.c.h.b16 %v878
    %v1061 = vunpack.c.l.b16 %v879
    %v1062 = vunpack.c.h.b16 %v879
    %v1063 = vunpack.c.l.b16 %v880
    %v1064 = vunpack.c.h.b16 %v880
    %v1065 = vunpack.c.l.b16 %v881
    %v1066 = vunpack.c.h.b16 %v881
    %v1067 = vunpack.c.l.b16 %v882
    %v1068 = vunpack.c.h.b16 %v882
    %v1069 = vunpack.c.l.b16 %v883
    %v1070 = vunpack.c.h.b16 %v883
    %v1071 = vunpack.c.l.b16 %v884
    %v1072 = vunpack.c.h.b16 %v884
    %v1073 = vunpack.c.l.b16 %v885
    %v1074 = vunpack.c.h.b16 %v885
    %v1075 = vunpack.c.l.b16 %v886
    %v1076 = vunpack.c.h.b16 %v886
    %v1077 = vunpack.c.l.b16 %v887
    %v1078 = vunpack.c.h.b16 %v887
    %v1079 = vunpack.c.l.b16 %v888
    %v1080 = vunpack.c.h.b16 %v888
    %v1081 = vunpack.c.l.b16 %v889
    %v1082 = vunpack.c.h.b16 %v889
    %v1083 = vunpack.c.l.b16 %v890
    %v1084 = vunpack.c.h.b16 %v890
    %v1085 = vunpack.c.l.b16 %v891
    %v1086 = vunpack.c.h.b16 %v891
    %v1087 = vunpack.c.l.b16 %v892
    %v1088 = vunpack.c.h.b16 %v892
    %v1089 = vunpack.c.l.b16 %v893
    %v1090 = vunpack.c.h.b16 %v893
    %v1091 = vunpack.c.l.b16 %v894
    %v1092 = vunpack.c.h.b16 %v894
    %v1093 = vunpack.c.l.b16 %v895
    %v1094 = vunpack.c.h.b16 %v895
    %v1095 = vunpack.c.l.b16 %v896
    %v1096 = vunpack.c.h.b16 %v896
    %v1097 = vunpack.c.l.b16 %v897
    %v1098 = vunpack.c.h.b16 %v897
    %v1099 = vunpack.c.l.b16 %v898
    %v1100 = vunpack.c.h.b16 %v898
    %v1101 = vunpack.c.l.b16 %v899
    %v1102 = vunpack.c.h.b16 %v899
    %v1103 = vunpack.c.l.b16 %v900
    %v1104 = vunpack.c.h.b16 %v900
    %v1105 = vpack.c.b16 %v979, %v977
    %v1106 = vpack.c.b16 %v980, %v978
    %v1107 = vpack.c.b16 %v983, %v981
    %v1108 = vpack.c.b16 %v984, %v982
    %v1109 = vpack.c.b16 %v987, %v985
    %v1110 = vpack.c.b16 %v988, %v986
    %v1111 = vpack.c.b16 %v991, %v989
    %v1112 = vpack.c.b16 %v992, %v990
    %v1113 = vpack.c.b16 %v995, %v993
    %v1114 = vpack.c.b16 %v996, %v994
    %v1115 = vpack.c.b16 %v999, %v997
    %v1116 = vpack.c.b16 %v1000, %v998
    %v1117 = vpack.c.b16 %v1003, %v1001
    %v1118 = vpack.c.b16 %v1004, %v1002
    %v1119 = vpack.c.b16 %v1007, %v1005
    %v1120 = vpack.c.b16 %v1008, %v1006
    %v1121 = vpack.c.b16 %v1011, %v1009
    %v1122 = vpack.c.b16 %v1012, %v1010
    %v1123 = vpack.c.b16 %v1015, %v1013
    %v1124 = vpack.c.b16 %v1016, %v1014
    %v1125 = vpack.c.b16 %v1019, %v1017
    %v1126 = vpack.c.b16 %v1020, %v1018
    %v1127 = vpack.c.b16 %v1023, %v1021
    %v1128 = vpack.c.b16 %v1024, %v1022
    %v1129 = vpack.c.b16 %v1027, %v1025
    %v1130 = vpack.c.b16 %v1028, %v1026
    %v1131 = vpack.c.b16 %v1031, %v1029
    %v1132 = vpack.c.b16 %v1032, %v1030
    %v1133 = vpack.c.b16 %v1035, %v1033
    %v1134 = vpack.c.b16 %v1036, %v1034
    %v1135 = vpack.c.b16 %v1039, %v1037
    %v1136 = vpack.c.b16 %v1040, %v1038
    %v1137 = vpack.c.b16 %v1043, %v1041
    %v1138 = vpack.c.b16 %v1044, %v1042
    %v1139 = vpack.c.b16 %v1047, %v1045
    %v1140 = vpack.c.b16 %v1048, %v1046
    %v1141 = vpack.c.b16 %v1051, %v1049
    %v1142 = vpack.c.b16 %v1052, %v1050
    %v1143 = vpack.c.b16 %v1055, %v1053
    %v1144 = vpack.c.b16 %v1056, %v1054
    %v1145 = vpack.c.b16 %v1059, %v1057
    %v1146 = vpack.c.b16 %v1060, %v1058
    %v1147 = vpack.c.b16 %v1063, %v1061
    %v1148 = vpack.c.b16 %v1064, %v1062
    %v1149 = vpack.c.b16 %v1067, %v1065
    %v1150 = vpack.c.b16 %v1068, %v1066
    %v1151 = vpack.c.b16 %v1071, %v1069
    %v1152 = vpack.c.b16 %v1072, %v1070
    %v1153 = vpack.c.b16 %v1075, %v1073
    %v1154 = vpack.c.b16 %v1076, %v1074
    %v1155 = vpack.c.b16 %v1079, %v1077
    %v1156 = vpack.c.b16 %v1080, %v1078
    %v1157 = vpack.c.b16 %v1083, %v1081
    %v1158 = vpack.c.b16 %v1084, %v1082
    %v1159 = vpack.c.b16 %v1087, %v1085
    %v1160 = vpack.c.b16 %v1088, %v1086
    %v1161 = vpack.c.b16 %v1091, %v1089
    %v1162 = vpack.c.b16 %v1092, %v1090
    %v1163 = vpack.c.b16 %v1095, %v1093
    %v1164 = vpack.c.b16 %v1096, %v1094
    %v1165 = vpack.c.b16 %v1099, %v1097
    %v1166 = vpack.c.b16 %v1100, %v1098
    %v1167 = vpack.c.b16 %v1103, %v1101
    %v1168 = vpack.c.b16 %v1104, %v1102
    %1233 = vmatprep.subr.bf16.mxu0 %v1106
    %1234 = vmatpush1.bf16.msra.mxu0 %v1105
    %1235 = vmatprep.subr.bf16.mxu0 %v1108
    %1236 = vmatpush1.bf16.msra.mxu0 %v1107
    %1237 = vmatprep.subr.bf16.mxu0 %v1110
    %1238 = vmatpush1.bf16.msra.mxu0 %v1109
    %1239 = vmatprep.subr.bf16.mxu0 %v1112
    %1240 = vmatpush1.bf16.msra.mxu0 %v1111
    %1241 = vmatprep.subr.bf16.mxu0 %v1114
    %1242 = vmatpush1.bf16.msra.mxu0 %v1113
    %1243 = vmatprep.subr.bf16.mxu0 %v1116
    %1244 = vmatpush1.bf16.msra.mxu0 %v1115
    %1245 = vmatprep.subr.bf16.mxu0 %v1118
    %1246 = vmatpush1.bf16.msra.mxu0 %v1117
    %1247 = vmatprep.subr.bf16.mxu0 %v1120
    %1248 = vmatpush1.bf16.msra.mxu0 %v1119
    %1249 = vmatprep.subr.bf16.mxu0 %v1122
    %1250 = vmatpush1.bf16.msra.mxu0 %v1121
    %1251 = vmatprep.subr.bf16.mxu0 %v1124
    %1252 = vmatpush1.bf16.msra.mxu0 %v1123
    %1253 = vmatprep.subr.bf16.mxu0 %v1126
    %1254 = vmatpush1.bf16.msra.mxu0 %v1125
    %1255 = vmatprep.subr.bf16.mxu0 %v1128
    %1256 = vmatpush1.bf16.msra.mxu0 %v1127
    %1257 = vmatprep.subr.bf16.mxu0 %v1130
    %1258 = vmatpush1.bf16.msra.mxu0 %v1129
    %1259 = vmatprep.subr.bf16.mxu0 %v1132
    %1260 = vmatpush1.bf16.msra.mxu0 %v1131
    %1261 = vmatprep.subr.bf16.mxu0 %v1134
    %1262 = vmatpush1.bf16.msra.mxu0 %v1133
    %1263 = vmatprep.subr.bf16.mxu0 %v1136
    %1264 = vmatpush1.bf16.msra.mxu0 %v1135
    %1265 = vmatprep.mubr.bf16.mxu0 %v834
    %1266 = vmatmul.mubr.bf16.gmra.mrb[0].mxu0 %v833
    %v1267 = vpop.f32.mrb[0].mxu0
    %v1268 = vadd.f32 %v906, %v1267
    %v1269 = vpop.f32.mrb[0].mxu0
    %v1270 = vadd.f32 %v910, %v1269
    %v1271 = vpop.f32.mrb[0].mxu0
    %v1272 = vpop.f32.mrb[0].mxu0
    %1273 = vdwg.mxu0
    %1274 = vmatprep.subr.bf16.mxu0 %v1138
    %1275 = vmatpush1.bf16.msra.mxu0 %v1137
    %1276 = vmatprep.subr.bf16.mxu0 %v1140
    %1277 = vmatpush1.bf16.msra.mxu0 %v1139
    %1278 = vmatprep.subr.bf16.mxu0 %v1142
    %1279 = vmatpush1.bf16.msra.mxu0 %v1141
    %1280 = vmatprep.subr.bf16.mxu0 %v1144
    %1281 = vmatpush1.bf16.msra.mxu0 %v1143
    %1282 = vmatprep.subr.bf16.mxu0 %v1146
    %1283 = vmatpush1.bf16.msra.mxu0 %v1145
    %1284 = vmatprep.subr.bf16.mxu0 %v1148
    %1285 = vmatpush1.bf16.msra.mxu0 %v1147
    %1286 = vmatprep.subr.bf16.mxu0 %v1150
    %1287 = vmatpush1.bf16.msra.mxu0 %v1149
    %1288 = vmatprep.subr.bf16.mxu0 %v1152
    %1289 = vmatpush1.bf16.msra.mxu0 %v1151
    %1290 = vmatprep.subr.bf16.mxu0 %v1154
    %1291 = vmatpush1.bf16.msra.mxu0 %v1153
    %1292 = vmatprep.subr.bf16.mxu0 %v1156
    %1293 = vmatpush1.bf16.msra.mxu0 %v1155
    %1294 = vmatprep.subr.bf16.mxu0 %v1158
    %1295 = vmatpush1.bf16.msra.mxu0 %v1157
    %1296 = vmatprep.subr.bf16.mxu0 %v1160
    %1297 = vmatpush1.bf16.msra.mxu0 %v1159
    %1298 = vmatprep.subr.bf16.mxu0 %v1162
    %1299 = vmatpush1.bf16.msra.mxu0 %v1161
    %1300 = vmatprep.subr.bf16.mxu0 %v1164
    %1301 = vmatpush1.bf16.msra.mxu0 %v1163
    %1302 = vmatprep.subr.bf16.mxu0 %v1166
    %1303 = vmatpush1.bf16.msra.mxu0 %v1165
    %1304 = vmatprep.subr.bf16.mxu0 %v1168
    %1305 = vmatpush1.bf16.msra.mxu0 %v1167
    %1306 = vmatprep.mubr.bf16.mxu0 %v836
    %1307 = vmatmul.mubr.bf16.gmra.mrb[0].mxu0 %v835
    %v1308 = vpop.f32.mrb[0].mxu0
    %v1309 = vadd.f32 %v1268, %v1308
    %v1310 = vpop.f32.mrb[0].mxu0
    %v1311 = vadd.f32 %v1270, %v1310
    %v1312 = vpop.f32.mrb[0].mxu0
    %v1313 = vpop.f32.mrb[0].mxu0
    %1314 = vdwg.mxu0
    %v1315 = vsub.f32 0.0, %v1309
    %v1316 = vmul.f32 %v1315, 1.442695
    %v1317 = vpow.pop %v1316
    %v1318 = vadd.f32 %v1317, 1.0
    %v1319 = vrcp.pop %v1318
    %1320 = vst [vmem:[#allocation8] sm:$0xff] %v1319
    %v1321 = vlaneseq
    %v1322 = vand.u32 %v1321, 127
    %vm1323 = vcmp.lt.s32.totalorder %v1322, 4
    %v1324 = vsel %vm1323, %v1311, -inf
    %1325 = vmax.xlane.f32.xlu0 %v1324
    %v1326 = vpop.xlane.xlu0 %1325
    %v1327 = vsub.f32 %v1324, %v1326
    %v1328 = vmul.f32 %v1327, 1.442695
    %v1329 = vpow.pop %v1328
    %1330 = vadd.xlane.f32.xlu0 %v1329
    %v1331 = vpop.xlane.xlu0 %1330
    %v1332 = vrcp.pop %v1331
    %v1333 = vmul.f32 %v1329, %v1332
    %1334 = vst [vmem:[#allocation8 + $0x8] sm:$0xff] %v1333
    // Predicated region
    $region34: #{tpu_custom_call.1} parent=1 // pred_check
      _
    $region35: #{tpu_custom_call.1} parent=1 // pred_check_branch
      %1336 = sbr.rel (0) target = $region37
    $region36: #{tpu_custom_call.1} parent=1 // pred_region
      %s1338 = ssub.s32 256, 256
      %1339 = vsyncadd [#allocation4], %s1338
      %s1341 = sshll.u32 [#allocation8], 4
      %s1342 = int_to_ptr.vmem [resolvable:$true] %s1341
      %1344 = dma.vmem_to_hbm [thread:$0]  %s1342, 256, %s5, [#allocation4]
    $region37: #{tpu_custom_call.1} parent=1 // pred_fallthru
      _
    // Predicated region
    $region38: #{tpu_custom_call.1} parent=1 // pred_check
      _
    $region39: #{tpu_custom_call.1} parent=1 // pred_check_branch
      %1346 = sbr.rel (0) target = $region41
    $region40: #{tpu_custom_call.1} parent=1 // pred_region
      %1347 = dma.done [#allocation4], 256
    $region41: #{tpu_custom_call.1} parent=1 // pred_fallthru
      _
    %1348 = vsyncpa [#allocation3], 1
    %1349 = vsyncpa [#allocation6], 1
    %1350 = vsyncpa [#allocation4], 1

</llo_original>
